<compile_context>
chip_gen: v6e
topology: v6e:2x2x1
jax: 0.10.0
libtpu: 0.0.40
codegen_flags: <defaults>
</compile_context>

<pallas_src>
import functools

import jax
import jax.numpy as jnp
from jax.experimental import pallas as pl
from jax.experimental.pallas import tpu as pltpu

_LANE = 128        # lane width (last dim)
_SUBLANE = 8       # f32 sublane width (second-to-last dim)
_BF16_PACK = 16    # bf16 sublane packing granularity


def _round_up(n, m):
    return ((n + m - 1) // m) * m


# ----------------------------- Fused MLP kernel ----------------------------- #

def _make_ffn_kernel(n_layers):
    """Fused MLP kernel for `n_layers` Linear layers.

    Kernel argument order: (x_ref, w0, b0, w1, b1, ..., o_ref).
    All intermediates stay in vregs/VMEM; only the final logits are stored.
    """

    def kernel(x_ref, *refs):
        o_ref = refs[-1]
        h = x_ref[...]                                          # already bf16
        for i in range(n_layers):
            w_ref = refs[2 * i]
            b_ref = refs[2 * i + 1]
            y = jnp.dot(h, w_ref[...], preferred_element_type=jnp.float32)
            y = y + b_ref[...]                                  # f32 epilogue: bias
            if i != n_layers - 1:
                y = jnp.maximum(y, 0.0)                         # f32 epilogue: ReLU
                # TODO(synk): dropout is identity (eval semantics); training-mode
                # masking would use pltpu.prng_seed / pltpu.prng_random_bits here.
                h = y.astype(jnp.bfloat16)
            else:
                o_ref[...] = y.astype(o_ref.dtype)              # lane-dense store

    return kernel


# --------------------------- Parameter construction ------------------------- #

def init_ffn_params(key, n_classes, n_features, hidden_size, layers):
    """PyTorch nn.Linear-style init: U(-1/sqrt(fan_in), 1/sqrt(fan_in)).

    Returns a list of (W, b) with W shaped (out_features, in_features).
    """
    dims = [n_features] + [hidden_size] * layers + [n_classes]
    params = []
    for i in range(len(dims) - 1):
        fan_in, fan_out = dims[i], dims[i + 1]
        key, kw, kb = jax.random.split(key, 3)
        bound = 1.0 / jnp.sqrt(fan_in)
        w = jax.random.uniform(kw, (fan_out, fan_in), jnp.float32, -bound, bound)
        b = jax.random.uniform(kb, (fan_out,), jnp.float32, -bound, bound)
        params.append((w, b))
    return params


def prepare_kernel_params(params):
    """One-time prep (outside the jitted forward):

    - transpose W to (in, out) so the kernel contracts without a transpose,
    - do NOT pad the contraction dim to 128: the first layer's input dim is
      left at the true feature count (so x needs no feature padding), hidden
      dims are padded only to 16 (bf16 sublane packing),
    - pad only the FINAL output lane dim to 128 (lane-dense unmasked stores),
    - cast weights to bf16 (MXU dtype, halves weight HBM/DMA traffic),
    - keep biases in f32 (f32 epilogue), shaped (1, out_p) for broadcast.

    Zero padding is mathematically inert (zero rows/cols, zero bias).
    """
    n = len(params)
    ws, bs = [], []
    for i, (w, b) in enumerate(params):
        out_f, in_f = w.shape
        in_p = in_f if i == 0 else _round_up(in_f, _BF16_PACK)
        out_p = _round_up(out_f, _LANE) if i == n - 1 else _round_up(out_f, _BF16_PACK)
        w_t = jnp.zeros((in_p, out_p), jnp.float32).at[:in_f, :out_f].set(w.T)
        ws.append(w_t.astype(jnp.bfloat16))
        b_p = jnp.zeros((1, out_p), jnp.float32).at[0, :out_f].set(b)
        bs.append(b_p)
    return (tuple(ws), tuple(bs))


# ------------------------------- Forward pass -------------------------------- #

@functools.partial(jax.jit, static_argnames=("n_classes", "batch_tile"))
def feedforward_forward(x, kernel_params, n_classes, batch_tile=512):
    """Eval-mode forward of FeedforwardNetwork as one fused Pallas kernel.

    x: (batch, n_features) float32
    kernel_params: output of prepare_kernel_params
    """
    ws, bs = kernel_params
    n_layers = len(ws)
    B, F = x.shape
    f_in = ws[0].shape[0]
    assert F == f_in, (F, f_in)
    out_p = ws[-1].shape[1]

    # --- batch tiling: multiple of 8, large by default (amortize ~0.35us/step),
    # and >=2 grid steps for big batches so v7x can shard across both TCs.
    b_eff = _round_up(max(B, _SUBLANE), _SUBLANE)
    tb = max(_SUBLANE, (min(batch_tile, b_eff) // _SUBLANE) * _SUBLANE)
    if b_eff >= 2 * 256 and pl.cdiv(b_eff, tb) < 2:
        tb = _round_up(pl.cdiv(b_eff, 2), _SUBLANE)
    bp = _round_up(b_eff, tb)

    # bf16 cast in the wrapper (halves x DMA bytes, no in-kernel VPU cast);
    # pad only the batch remainder — no padded HBM copy in the common case.
    xb = x.astype(jnp.bfloat16)
    if bp != B:
        xb = jnp.pad(xb, ((0, bp - B), (0, 0)))

    in_specs = [pl.BlockSpec((tb, f_in), lambda i: (i, 0))]
    operands = [xb]
    for w, b in zip(ws, bs):
        # Constant index_map -> single-buffer the resident weights/biases.
        in_specs.append(pl.BlockSpec(w.shape, lambda i: (0, 0),
                                     pipeline_mode=pl.Buffered(1)))
        in_specs.append(pl.BlockSpec(b.shape, lambda i: (0, 0),
                                     pipeline_mode=pl.Buffered(1)))
        operands.extend([w, b])

    # Explicit VMEM budget (v5e default scoped limit is only 16 MiB):
    # single-buffered weights/biases + double-buffered x/out tiles, 2x headroom.
    weight_bytes = sum(int(w.size) * 2 for w in ws) + sum(int(b.size) * 4 for b in bs)
    tile_bytes = 2 * (tb * f_in * 2 + tb * out_p * 4)
    vmem_limit = int(min(100 * 1024 * 1024,
                         max(32 * 1024 * 1024, 2 * (weight_bytes + tile_bytes))))

    # TODO(synk): once hidden_size reaches ~2048+ (32 MiB+ per bf16 weight),
    # add N/K grid axes so weights are streamed instead of fully resident
    # (required to stay within v7x's 64 MiB VMEM).
    out = pl.pallas_call(
        _make_ffn_kernel(n_layers),
        out_shape=jax.ShapeDtypeStruct((bp, out_p), jnp.float32),
        grid=(bp // tb,),
        in_specs=in_specs,
        out_specs=pl.BlockSpec((tb, out_p), lambda i: (i, 0)),
        compiler_params=pltpu.CompilerParams(
            dimension_semantics=("parallel",),
            vmem_limit_bytes=vmem_limit),
    )(*operands)

    return out[:B, :n_classes]


# ----------------------------------- Main ------------------------------------ #

if __name__ == "__main__":
    # Small, MLP-consistent shapes (same as the PyTorch module would see).
    batch = 8
    n_features = 32
    hidden_size = 32
    n_classes = 8
    layers = 2            # 2 hidden Linear layers + final classifier layer
    dropout = 0.3         # identity at inference

    key = jax.random.PRNGKey(0)
    key, kx = jax.random.split(key)
    x = jax.random.normal(kx, (batch, n_features), jnp.float32)

    params = init_ffn_params(key, n_classes, n_features, hidden_size, layers)
    kparams = prepare_kernel_params(params)

    logits = feedforward_forward(x, kparams, n_classes=n_classes)
    jax.block_until_ready(logits)

    assert logits.shape == (batch, n_classes), logits.shape
    assert logits.dtype == jnp.float32

    # Pure-JAX reference with the same bf16-matmul / f32-epilogue recipe.
    ref = x.astype(jnp.bfloat16)
    for i, (w, b) in enumerate(params):
        y = jnp.dot(ref, w.T.astype(jnp.bfloat16),
                    preferred_element_type=jnp.float32) + b
        if i != len(params) - 1:
            ref = jnp.maximum(y, 0.0).astype(jnp.bfloat16)
        else:
            ref = y
    assert jnp.allclose(logits, ref, atol=1e-3, rtol=1e-3), (
        float(jnp.max(jnp.abs(logits - ref))))

    # Sanity vs full-f32 math (loose tolerance for bf16 rounding).
    ref32 = x
    for i, (w, b) in enumerate(params):
        y = ref32 @ w.T + b
        ref32 = jnp.maximum(y, 0.0) if i != len(params) - 1 else y
    assert jnp.allclose(logits, ref32, atol=5e-2, rtol=5e-2), (
        float(jnp.max(jnp.abs(logits - ref32))))

    print("KERNEL_OK")
</pallas_src>

<mosaic_0001>
module attributes {stable_mosaic.version = 11 : i64} {
  func.func @kernel(%arg0: i32, %arg1: memref<8x32xbf16, #tpu.memory_space<vmem>>, %arg2: memref<32x32xbf16, #tpu.memory_space<vmem>>, %arg3: memref<1x32xf32, #tpu.memory_space<vmem>>, %arg4: memref<32x32xbf16, #tpu.memory_space<vmem>>, %arg5: memref<1x32xf32, #tpu.memory_space<vmem>>, %arg6: memref<32x128xbf16, #tpu.memory_space<vmem>>, %arg7: memref<1x128xf32, #tpu.memory_space<vmem>>, %arg8: memref<8x128xf32, #tpu.memory_space<vmem>>) attributes {dimension_semantics = [#tpu.dimension_semantics<parallel>], iteration_bounds = array<i64: 1>, scalar_prefetch = 0 : i64, scratch_operands = 0 : i64, tpu.core_type = #tpu.core_type<tc>, window_params = [{transform_indices = @transform_0, window_bounds = array<i64: 8, 32>}, {pipeline_mode = #tpu.pipeline_mode<synchronous>, transform_indices = @transform_1, window_bounds = array<i64: 32, 32>}, {pipeline_mode = #tpu.pipeline_mode<synchronous>, transform_indices = @transform_2, window_bounds = array<i64: 1, 32>}, {pipeline_mode = #tpu.pipeline_mode<synchronous>, transform_indices = @transform_3, window_bounds = array<i64: 32, 32>}, {pipeline_mode = #tpu.pipeline_mode<synchronous>, transform_indices = @transform_4, window_bounds = array<i64: 1, 32>}, {pipeline_mode = #tpu.pipeline_mode<synchronous>, transform_indices = @transform_5, window_bounds = array<i64: 32, 128>}, {pipeline_mode = #tpu.pipeline_mode<synchronous>, transform_indices = @transform_6, window_bounds = array<i64: 1, 128>}, {transform_indices = @transform_7, window_bounds = array<i64: 8, 128>}]} {
    %c0 = arith.constant 0 : index
    %c0_0 = arith.constant 0 : index
    %0 = vector.load %arg1[%c0, %c0_0] : memref<8x32xbf16, #tpu.memory_space<vmem>>, vector<8x32xbf16>
    %c0_1 = arith.constant 0 : index
    %c0_2 = arith.constant 0 : index
    %1 = vector.load %arg2[%c0_1, %c0_2] : memref<32x32xbf16, #tpu.memory_space<vmem>>, vector<32x32xbf16>
    %cst = arith.constant dense<0.000000e+00> : vector<8x32xf32>
    %2 = tpu.matmul %0, %1, %cst {dimension_numbers = #tpu.dot_dimension_numbers<[1], [0], [0], [1], [0, 0, 1, 1], [], []>} : vector<8x32xbf16>, vector<32x32xbf16>, vector<8x32xf32> -> vector<8x32xf32>
    %c0_3 = arith.constant 0 : index
    %c0_4 = arith.constant 0 : index
    %3 = vector.load %arg3[%c0_3, %c0_4] : memref<1x32xf32, #tpu.memory_space<vmem>>, vector<1x32xf32>
    %4 = vector.broadcast %3 : vector<1x32xf32> to vector<8x32xf32>
    %5 = arith.addf %2, %4 : vector<8x32xf32>
    %cst_5 = arith.constant 0.000000e+00 : f32
    %6 = vector.broadcast %cst_5 : f32 to vector<8x32xf32>
    %7 = arith.maximumf %5, %6 : vector<8x32xf32>
    %8 = arith.truncf %7 : vector<8x32xf32> to vector<8x32xbf16>
    %c0_6 = arith.constant 0 : index
    %c0_7 = arith.constant 0 : index
    %9 = vector.load %arg4[%c0_6, %c0_7] : memref<32x32xbf16, #tpu.memory_space<vmem>>, vector<32x32xbf16>
    %cst_8 = arith.constant dense<0.000000e+00> : vector<8x32xf32>
    %10 = tpu.matmul %8, %9, %cst_8 {dimension_numbers = #tpu.dot_dimension_numbers<[1], [0], [0], [1], [0, 0, 1, 1], [], []>} : vector<8x32xbf16>, vector<32x32xbf16>, vector<8x32xf32> -> vector<8x32xf32>
    %c0_9 = arith.constant 0 : index
    %c0_10 = arith.constant 0 : index
    %11 = vector.load %arg5[%c0_9, %c0_10] : memref<1x32xf32, #tpu.memory_space<vmem>>, vector<1x32xf32>
    %12 = vector.broadcast %11 : vector<1x32xf32> to vector<8x32xf32>
    %13 = arith.addf %10, %12 : vector<8x32xf32>
    %cst_11 = arith.constant 0.000000e+00 : f32
    %14 = vector.broadcast %cst_11 : f32 to vector<8x32xf32>
    %15 = arith.maximumf %13, %14 : vector<8x32xf32>
    %16 = arith.truncf %15 : vector<8x32xf32> to vector<8x32xbf16>
    %c0_12 = arith.constant 0 : index
    %c0_13 = arith.constant 0 : index
    %17 = vector.load %arg6[%c0_12, %c0_13] : memref<32x128xbf16, #tpu.memory_space<vmem>>, vector<32x128xbf16>
    %cst_14 = arith.constant dense<0.000000e+00> : vector<8x128xf32>
    %18 = tpu.matmul %16, %17, %cst_14 {dimension_numbers = #tpu.dot_dimension_numbers<[1], [0], [0], [1], [0, 0, 1, 1], [], []>} : vector<8x32xbf16>, vector<32x128xbf16>, vector<8x128xf32> -> vector<8x128xf32>
    %c0_15 = arith.constant 0 : index
    %c0_16 = arith.constant 0 : index
    %19 = vector.load %arg7[%c0_15, %c0_16] : memref<1x128xf32, #tpu.memory_space<vmem>>, vector<1x128xf32>
    %20 = vector.broadcast %19 : vector<1x128xf32> to vector<8x128xf32>
    %21 = arith.addf %18, %20 : vector<8x128xf32>
    %c0_17 = arith.constant 0 : index
    %c0_18 = arith.constant 0 : index
    %22 = vector.load %arg8[%c0_17, %c0_18] : memref<8x128xf32, #tpu.memory_space<vmem>>, vector<8x128xf32>
    tpu.vector_store %arg8[%c0_17, %c0_18], %21 {strides = array<i32>} : memref<8x128xf32, #tpu.memory_space<vmem>>, vector<8x128xf32>,
    return
  }
  func.func @transform_0(%arg0: i32) -> (i32, i32) {
    %c0_i32 = arith.constant 0 : i32
    %c0_i32_0 = arith.constant 0 : i32
    return %arg0, %c0_i32 : i32, i32
  }
  func.func @transform_1(%arg0: i32) -> (i32, i32) {
    %c0_i32 = arith.constant 0 : i32
    %c0_i32_0 = arith.constant 0 : i32
    %c0_i32_1 = arith.constant 0 : i32
    return %c0_i32, %c0_i32_0 : i32, i32
  }
  func.func @transform_2(%arg0: i32) -> (i32, i32) {
    %c0_i32 = arith.constant 0 : i32
    %c0_i32_0 = arith.constant 0 : i32
    %c0_i32_1 = arith.constant 0 : i32
    return %c0_i32, %c0_i32_0 : i32, i32
  }
  func.func @transform_3(%arg0: i32) -> (i32, i32) {
    %c0_i32 = arith.constant 0 : i32
    %c0_i32_0 = arith.constant 0 : i32
    %c0_i32_1 = arith.constant 0 : i32
    return %c0_i32, %c0_i32_0 : i32, i32
  }
  func.func @transform_4(%arg0: i32) -> (i32, i32) {
    %c0_i32 = arith.constant 0 : i32
    %c0_i32_0 = arith.constant 0 : i32
    %c0_i32_1 = arith.constant 0 : i32
    return %c0_i32, %c0_i32_0 : i32, i32
  }
  func.func @transform_5(%arg0: i32) -> (i32, i32) {
    %c0_i32 = arith.constant 0 : i32
    %c0_i32_0 = arith.constant 0 : i32
    %c0_i32_1 = arith.constant 0 : i32
    return %c0_i32, %c0_i32_0 : i32, i32
  }
  func.func @transform_6(%arg0: i32) -> (i32, i32) {
    %c0_i32 = arith.constant 0 : i32
    %c0_i32_0 = arith.constant 0 : i32
    %c0_i32_1 = arith.constant 0 : i32
    return %c0_i32, %c0_i32_0 : i32, i32
  }
  func.func @transform_7(%arg0: i32) -> (i32, i32) {
    %c0_i32 = arith.constant 0 : i32
    %c0_i32_0 = arith.constant 0 : i32
    return %arg0, %c0_i32 : i32, i32
  }
}

</mosaic_0001>

<llo_original>
// kernel: feedforward_forward.1
$region0: #{feedforward_forward.1}
  #allocation0 [shape = 'u32[]', space=smem, size = 0x4, offset = 0x4, fixed_abs, tag = 'smem constant byte address 0x4 - core index']
  #allocation1 [shape = 'u32[144,128]{1,0:T(1,128)}', space=vmem, size = 0x12000, scoped, tag = 'internal scratch']
  %s0 = inlined_call_operand.vmem [shape: bf16[8,32], index: 0, kind: input, shape index: {}]
  %s1 = inlined_call_operand.hbm [shape: bf16[32,32], index: 1, kind: input, shape index: {}]
  %s2 = inlined_call_operand.vmem [shape: f32[1,32], index: 2, kind: input, shape index: {}]
  %s3 = inlined_call_operand.hbm [shape: bf16[32,32], index: 3, kind: input, shape index: {}]
  %s4 = inlined_call_operand.vmem [shape: f32[1,32], index: 4, kind: input, shape index: {}]
  %s5 = inlined_call_operand.vmem [shape: bf16[32,128], index: 5, kind: input, shape index: {}]
  %s6 = inlined_call_operand.vmem [shape: f32[1,128], index: 6, kind: input, shape index: {}]
  %s7 = inlined_call_operand.hbm [shape: f32[8,128], index: 7, kind: output, shape index: {}]
  %s8 = sld [smem:[#allocation0]]
  $region46: #{feedforward_forward.1} parent=0
    _
  %s10 = ssub.s32 1, %s8
  %s11 = scalar_select 0, %s10, %s8
  $region1: #{feedforward_forward.1} parent=0
    #allocation2 [shape = 'u8[8192]{0}', space=vmem, size = 0x2000, scoped, tag = 'input window, operand 1, single buffered']
    #allocation3 [shape = 's32[1]{0}', space=sflag, size = 0x4, scoped, tag = 'scoped memory for feedforward_forward.1']
    #allocation4 [shape = 's32[1]{0}', space=sflag, size = 0x4, scoped, tag = 'scoped memory for feedforward_forward.1']
    #allocation5 [shape = 'u8[8192]{0}', space=vmem, size = 0x2000, scoped, tag = 'input window, operand 3, single buffered']
    #allocation6 [shape = 's32[1]{0}', space=sflag, size = 0x4, scoped, tag = 'scoped memory for feedforward_forward.1']
    #allocation7 [shape = 'u8[4096]{0}', space=vmem, size = 0x1000, scoped, tag = 'output window, operand 0, single buffered']
    %12 = vsyncpa [#allocation3], 0
    %13 = vsyncpa [#allocation6], 0
    %14 = vsyncpa [#allocation4], 0
    // Predicated region
    $region2: #{feedforward_forward.1} parent=1 // pred_check
      _
    $region3: #{feedforward_forward.1} parent=1 // pred_check_branch
      %16 = sbr.rel (0) target = $region5
    $region4: #{feedforward_forward.1} parent=1 // pred_region
      _
    $region5: #{feedforward_forward.1} parent=1 // pred_fallthru
      _
    // Predicated region
    $region6: #{feedforward_forward.1} parent=1 // pred_check
      _
    $region7: #{feedforward_forward.1} parent=1 // pred_check_branch
      %18 = sbr.rel (0) target = $region9
    $region8: #{feedforward_forward.1} parent=1 // pred_region
      %s20 = ssub.s32 256, 256
      %21 = vsyncadd [#allocation3], %s20
      %s22 = sshll.u32 [#allocation2], 4
      %s23 = int_to_ptr.vmem [resolvable:$true] %s22
      %28 = dma.hbm_to_vmem [thread:$0]  %s1, 256, %s23, [#allocation3], 64, 64, 4
    $region9: #{feedforward_forward.1} parent=1 // pred_fallthru
      _
    // Predicated region
    $region10: #{feedforward_forward.1} parent=1 // pred_check
      _
    $region11: #{feedforward_forward.1} parent=1 // pred_check_branch
      %30 = sbr.rel (0) target = $region13
    $region12: #{feedforward_forward.1} parent=1 // pred_region
      _
    $region13: #{feedforward_forward.1} parent=1 // pred_fallthru
      _
    // Predicated region
    $region14: #{feedforward_forward.1} parent=1 // pred_check
      _
    $region15: #{feedforward_forward.1} parent=1 // pred_check_branch
      %32 = sbr.rel (0) target = $region17
    $region16: #{feedforward_forward.1} parent=1 // pred_region
      %s34 = ssub.s32 256, 256
      %35 = vsyncadd [#allocation6], %s34
      %s36 = sshll.u32 [#allocation5], 4
      %s37 = int_to_ptr.vmem [resolvable:$true] %s36
      %42 = dma.hbm_to_vmem [thread:$0]  %s3, 256, %s37, [#allocation6], 64, 64, 4
    $region17: #{feedforward_forward.1} parent=1 // pred_fallthru
      _
    // Predicated region
    $region18: #{feedforward_forward.1} parent=1 // pred_check
      _
    $region19: #{feedforward_forward.1} parent=1 // pred_check_branch
      %44 = sbr.rel (0) target = $region21
    $region20: #{feedforward_forward.1} parent=1 // pred_region
      _
    $region21: #{feedforward_forward.1} parent=1 // pred_fallthru
      _
    // Predicated region
    $region22: #{feedforward_forward.1} parent=1 // pred_check
      _
    $region23: #{feedforward_forward.1} parent=1 // pred_check_branch
      %46 = sbr.rel (0) target = $region25
    $region24: #{feedforward_forward.1} parent=1 // pred_region
      _
    $region25: #{feedforward_forward.1} parent=1 // pred_fallthru
      _
    // Predicated region
    $region26: #{feedforward_forward.1} parent=1 // pred_check
      _
    $region27: #{feedforward_forward.1} parent=1 // pred_check_branch
      %48 = sbr.rel (0) target = $region29
    $region28: #{feedforward_forward.1} parent=1 // pred_region
      _
    $region29: #{feedforward_forward.1} parent=1 // pred_fallthru
      _
    // Predicated region
    $region30: #{feedforward_forward.1} parent=1 // pred_check
      _
    $region31: #{feedforward_forward.1} parent=1 // pred_check_branch
      %50 = sbr.rel (0) target = $region33
    $region32: #{feedforward_forward.1} parent=1 // pred_region
      %51 = dma.done [#allocation3], 256
    $region33: #{feedforward_forward.1} parent=1 // pred_fallthru
      _
    // Predicated region
    $region34: #{feedforward_forward.1} parent=1 // pred_check
      _
    $region35: #{feedforward_forward.1} parent=1 // pred_check_branch
      %53 = sbr.rel (0) target = $region37
    $region36: #{feedforward_forward.1} parent=1 // pred_region
      %54 = dma.done [#allocation6], 256
    $region37: #{feedforward_forward.1} parent=1 // pred_fallthru
      _
    %v56 = vld [vmem:[%s0] sm:$0xf]
    %v57 = vld [vmem:[#allocation2] sm:$0xf]
    %v58 = vld [vmem:[#allocation2 + $0x4] sm:$0xf]
    %v59 = vld [vmem:[#allocation2 + $0x8] sm:$0xf]
    %v60 = vld [vmem:[#allocation2 + $0xc] sm:$0xf]
    %v61 = vld [vmem:[%s2] sm:$0x1]
    %v63 = vlaneseq
    %v64 = vshrl.u32 %v63, 7
    %v65 = vsub.s32 0, %v64
    %v66 = vrot.slane %v61, %v65
    %v72 = vunpack.c.l.b16 %v57
    %v73 = vunpack.c.l.b16 %v58
    %v74 = vunpack.c.l.b16 %v59
    %v75 = vunpack.c.l.b16 %v60
    %v76 = vpack.c.b16 %v73, %v72
    %v77 = vpack.c.b16 %v75, %v74
    %vm80 = vcmask 261120
    %v82 = vsel %vm80, %v56, 0
    %84 = vmatprep.subr.bf16.mxu0 0
    %85 = vmatpush1.bf16.msra.mxu0 0
    %86 = vmatprep.subr.bf16.mxu0 0
    %87 = vmatpush1.bf16.msra.mxu0 0
    %88 = vmatprep.subr.bf16.mxu0 0
    %89 = vmatpush1.bf16.msra.mxu0 0
    %90 = vmatprep.subr.bf16.mxu0 0
    %91 = vmatpush1.bf16.msra.mxu0 0
    %92 = vmatprep.subr.bf16.mxu0 0
    %93 = vmatpush1.bf16.msra.mxu0 0
    %94 = vmatprep.subr.bf16.mxu0 0
    %95 = vmatpush1.bf16.msra.mxu0 0
    %96 = vmatprep.subr.bf16.mxu0 0
    %97 = vmatpush1.bf16.msra.mxu0 %v77
    %98 = vmatprep.subr.bf16.mxu0 0
    %99 = vmatpush1.bf16.msra.mxu0 %v76
    %100 = vmatprep.subr.bf16.mxu0 0
    %101 = vmatpush2.bf16.msra.mxu0 0
    %102 = vmatprep.subr.bf16.mxu0 0
    %103 = vmatpush2.bf16.msra.mxu0 0
    %104 = vmatprep.subr.bf16.mxu0 0
    %105 = vmatpush2.bf16.msra.mxu0 0
    %106 = vmatprep.subr.bf16.mxu0 0
    %107 = vmatpush2.bf16.msra.mxu0 0
    %108 = vmatprep.subr.bf16.mxu0 0
    %109 = vmatpush2.bf16.msra.mxu0 0
    %110 = vmatprep.subr.bf16.mxu0 0
    %111 = vmatpush2.bf16.msra.mxu0 0
    %112 = vmatprep.subr.bf16.mxu0 0
    %113 = vmatpush2.bf16.msra.mxu0 0
    %114 = vmatprep.subr.bf16.mxu0 0
    %115 = vmatpush2.bf16.msra.mxu0 0
    %116 = vmatprep.mubr.bf16.mxu0 0
    %117 = vmatmul.mubr.bf16.gmra.mxu0 %v82
    %v118 = vpop.f32.mrf.mxu0
    %v119 = vadd.f32 %v66, %v118
    %v120 = vpop.f32.mrf.mxu0
    %v121 = vpop.f32.mrf.mxu0
    %v122 = vpop.f32.mrf.mxu0
    %123 = vdwg.mxu0
    %v124 = vmax.f32 %v119, 0.0
    %v125 = vpack.c.bf16 %v124, %v124
    %v126 = vld [vmem:[#allocation5] sm:$0xf]
    %v127 = vld [vmem:[#allocation5 + $0x4] sm:$0xf]
    %v128 = vld [vmem:[#allocation5 + $0x8] sm:$0xf]
    %v129 = vld [vmem:[#allocation5 + $0xc] sm:$0xf]
    %v130 = vld [vmem:[%s4] sm:$0x1]
    %v132 = vlaneseq
    %v133 = vshrl.u32 %v132, 7
    %v134 = vsub.s32 0, %v133
    %v135 = vrot.slane %v130, %v134
    %v141 = vunpack.c.l.b16 %v126
    %v142 = vunpack.c.l.b16 %v127
    %v143 = vunpack.c.l.b16 %v128
    %v144 = vunpack.c.l.b16 %v129
    %v145 = vpack.c.b16 %v142, %v141
    %v146 = vpack.c.b16 %v144, %v143
    %v150 = vsel %vm80, %v125, 0
    %152 = vmatprep.subr.bf16.mxu0 0
    %153 = vmatpush1.bf16.msra.mxu0 0
    %154 = vmatprep.subr.bf16.mxu0 0
    %155 = vmatpush1.bf16.msra.mxu0 0
    %156 = vmatprep.subr.bf16.mxu0 0
    %157 = vmatpush1.bf16.msra.mxu0 0
    %158 = vmatprep.subr.bf16.mxu0 0
    %159 = vmatpush1.bf16.msra.mxu0 0
    %160 = vmatprep.subr.bf16.mxu0 0
    %161 = vmatpush1.bf16.msra.mxu0 0
    %162 = vmatprep.subr.bf16.mxu0 0
    %163 = vmatpush1.bf16.msra.mxu0 0
    %164 = vmatprep.subr.bf16.mxu0 0
    %165 = vmatpush1.bf16.msra.mxu0 %v146
    %166 = vmatprep.subr.bf16.mxu0 0
    %167 = vmatpush1.bf16.msra.mxu0 %v145
    %168 = vmatprep.subr.bf16.mxu0 0
    %169 = vmatpush2.bf16.msra.mxu0 0
    %170 = vmatprep.subr.bf16.mxu0 0
    %171 = vmatpush2.bf16.msra.mxu0 0
    %172 = vmatprep.subr.bf16.mxu0 0
    %173 = vmatpush2.bf16.msra.mxu0 0
    %174 = vmatprep.subr.bf16.mxu0 0
    %175 = vmatpush2.bf16.msra.mxu0 0
    %176 = vmatprep.subr.bf16.mxu0 0
    %177 = vmatpush2.bf16.msra.mxu0 0
    %178 = vmatprep.subr.bf16.mxu0 0
    %179 = vmatpush2.bf16.msra.mxu0 0
    %180 = vmatprep.subr.bf16.mxu0 0
    %181 = vmatpush2.bf16.msra.mxu0 0
    %182 = vmatprep.subr.bf16.mxu0 0
    %183 = vmatpush2.bf16.msra.mxu0 0
    %184 = vmatprep.mubr.bf16.mxu0 0
    %185 = vmatmul.mubr.bf16.gmra.mxu0 %v150
    %v186 = vpop.f32.mrf.mxu0
    %v187 = vadd.f32 %v135, %v186
    %v188 = vpop.f32.mrf.mxu0
    %v189 = vpop.f32.mrf.mxu0
    %v190 = vpop.f32.mrf.mxu0
    %191 = vdwg.mxu0
    %v192 = vmax.f32 %v187, 0.0
    %v193 = vpack.c.bf16 %v192, %v192
    %v194 = vld [vmem:[%s5] sm:$0xf]
    %v195 = vld [vmem:[%s5 + $0x4] sm:$0xf]
    %v196 = vld [vmem:[%s5 + $0x8] sm:$0xf]
    %v197 = vld [vmem:[%s5 + $0xc] sm:$0xf]
    %v198 = vld [vmem:[%s6] sm:$0x1]
    %v200 = vlaneseq
    %v201 = vshrl.u32 %v200, 7
    %v202 = vsub.s32 0, %v201
    %v203 = vrot.slane %v198, %v202
    %v209 = vunpack.c.l.b16 %v194
    %v210 = vunpack.c.l.b16 %v195
    %v211 = vunpack.c.l.b16 %v196
    %v212 = vunpack.c.l.b16 %v197
    %v213 = vpack.c.b16 %v210, %v209
    %v214 = vpack.c.b16 %v212, %v211
    %v218 = vsel %vm80, %v193, 0
    %220 = vmatprep.subr.bf16.mxu0 0
    %221 = vmatpush1.bf16.msra.mxu0 0
    %222 = vmatprep.subr.bf16.mxu0 0
    %223 = vmatpush1.bf16.msra.mxu0 0
    %224 = vmatprep.subr.bf16.mxu0 0
    %225 = vmatpush1.bf16.msra.mxu0 0
    %226 = vmatprep.subr.bf16.mxu0 0
    %227 = vmatpush1.bf16.msra.mxu0 0
    %228 = vmatprep.subr.bf16.mxu0 0
    %229 = vmatpush1.bf16.msra.mxu0 0
    %230 = vmatprep.subr.bf16.mxu0 0
    %231 = vmatpush1.bf16.msra.mxu0 0
    %232 = vmatprep.subr.bf16.mxu0 0
    %233 = vmatpush1.bf16.msra.mxu0 %v214
    %234 = vmatprep.subr.bf16.mxu0 0
    %235 = vmatpush1.bf16.msra.mxu0 %v213
    %236 = vmatprep.subr.bf16.mxu0 0
    %237 = vmatpush2.bf16.msra.mxu0 0
    %238 = vmatprep.subr.bf16.mxu0 0
    %239 = vmatpush2.bf16.msra.mxu0 0
    %240 = vmatprep.subr.bf16.mxu0 0
    %241 = vmatpush2.bf16.msra.mxu0 0
    %242 = vmatprep.subr.bf16.mxu0 0
    %243 = vmatpush2.bf16.msra.mxu0 0
    %244 = vmatprep.subr.bf16.mxu0 0
    %245 = vmatpush2.bf16.msra.mxu0 0
    %246 = vmatprep.subr.bf16.mxu0 0
    %247 = vmatpush2.bf16.msra.mxu0 0
    %248 = vmatprep.subr.bf16.mxu0 0
    %249 = vmatpush2.bf16.msra.mxu0 0
    %250 = vmatprep.subr.bf16.mxu0 0
    %251 = vmatpush2.bf16.msra.mxu0 0
    %252 = vmatprep.mubr.bf16.mxu0 0
    %253 = vmatmul.mubr.bf16.gmra.mxu0 %v218
    %v254 = vpop.f32.mrf.mxu0
    %v255 = vadd.f32 %v203, %v254
    %v256 = vpop.f32.mrf.mxu0
    %v257 = vpop.f32.mrf.mxu0
    %v258 = vpop.f32.mrf.mxu0
    %259 = vdwg.mxu0
    %260 = vst [vmem:[#allocation7] sm:$0xff] %v255
    // Predicated region
    $region38: #{feedforward_forward.1} parent=1 // pred_check
      _
    $region39: #{feedforward_forward.1} parent=1 // pred_check_branch
      %262 = sbr.rel (0) target = $region41
    $region40: #{feedforward_forward.1} parent=1 // pred_region
      %s264 = ssub.s32 128, 128
      %265 = vsyncadd [#allocation4], %s264
      %s267 = sshll.u32 [#allocation7], 4
      %s268 = int_to_ptr.vmem [resolvable:$true] %s267
      %270 = dma.vmem_to_hbm [thread:$0]  %s268, 128, %s7, [#allocation4]
    $region41: #{feedforward_forward.1} parent=1 // pred_fallthru
      _
    // Predicated region
    $region42: #{feedforward_forward.1} parent=1 // pred_check
      _
    $region43: #{feedforward_forward.1} parent=1 // pred_check_branch
      %272 = sbr.rel (0) target = $region45
    $region44: #{feedforward_forward.1} parent=1 // pred_region
      %273 = dma.done [#allocation4], 128
    $region45: #{feedforward_forward.1} parent=1 // pred_fallthru
      _
    %274 = vsyncpa [#allocation3], 1
    %275 = vsyncpa [#allocation6], 1
    %276 = vsyncpa [#allocation4], 1

</llo_original>
